<compile_context>
chip_gen: v5e
topology: v5e:2x2
jax: 0.10.0
libtpu: 0.0.40
codegen_flags: <defaults>
</compile_context>

<pallas_src>
import functools

import jax
import jax.numpy as jnp
from jax import lax
from jax.experimental import pallas as pl
from jax.experimental.pallas import tpu as pltpu


def _round_up(v, m):
    return ((v + m - 1) // m) * m


def _device_info():
    """(two_tensorcores_per_chip, has_bf16_vpu) — defensive device probe."""
    kind = ""
    try:
        kind = jax.devices()[0].device_kind.lower()
    except Exception:
        pass
    two_tc = ("v7" in kind) or ("7x" in kind)
    bf16_vpu = not any(t in kind for t in ("v2", "v3", "v4", "v5"))
    return two_tc, bf16_vpu


def _gated_attn_kernel(x_ref, wab_ref, bab_ref, wct_ref, bc_ref, At_ref, *,
                       D, mxu_dtype, act_dtype):
    # x_ref   : (tile_n, L)        f32 input tile (cast to mxu_dtype in-kernel)
    # wab_ref : (L, 2D)            mxu_dtype, [Wa | Wb] (resident)
    # bab_ref : (1, 2D)            f32, [ba | bb]
    # wct_ref : (n_classes, D)     f32 (tiny, resident)
    # bc_ref  : (n_classes, 1)     f32
    # At_ref  : (n_classes, tile_n) output, lane-dense transposed A
    x = x_ref[...].astype(mxu_dtype)                      # VPU cast, no extra HBM pass
    ab = jnp.dot(x, wab_ref[...],
                 preferred_element_type=jnp.float32) + bab_ref[...]   # (tn, 2D) f32
    ab = ab.astype(act_dtype)
    a = jnp.tanh(ab[:, :D])                               # (tn, D)  attention_a
    g = jax.nn.sigmoid(ab[:, D:])                         # (tn, D)  attention_b
    gated = a * g                                         # (tn, D)  act_dtype
    # A^T[c, n] = sum_d Wc[d, c] * gated[n, d]  -> (n_classes, tn), lane-dense
    At = lax.dot_general(wct_ref[...].astype(act_dtype), gated,
                         dimension_numbers=(((1,), (1,)), ((), ())),
                         preferred_element_type=jnp.float32)
    At_ref[...] = (At + bc_ref[...]).astype(At_ref.dtype)


def attn_net_gated(x, wa, ba, wb, bb, wc, bc, *, tile_n=512,
                   compute_dtype=jnp.bfloat16):
    """Pallas forward for Attn_Net_Gated.  Returns (A, x); A is (N, n_classes)."""
    N, L = x.shape
    D = wa.shape[1]
    n_classes = wc.shape[1]

    if N == 0:  # degenerate bag
        return jnp.zeros((0, n_classes), x.dtype), x

    two_tc, bf16_vpu = _device_info()
    exact = jnp.dtype(compute_dtype) == jnp.dtype(jnp.float32)
    mxu_dtype = jnp.float32 if exact else jnp.dtype(compute_dtype)
    act_dtype = jnp.float32 if (exact or not bf16_vpu) else jnp.bfloat16

    # ---- host-side weight prep (tiny, one-time layout plumbing) -------------
    # Pad D to a multiple of 128 so the tanh/sigmoid halves are free lane
    # slices.  Padding is semantics-preserving: padded gated columns multiply
    # zero rows of Wc.
    D_pad = _round_up(D, 128)
    if D_pad != D:
        pd = D_pad - D
        wa_p = jnp.pad(wa, ((0, 0), (0, pd)))
        wb_p = jnp.pad(wb, ((0, 0), (0, pd)))
        ba_p = jnp.pad(ba, ((0, pd),))
        bb_p = jnp.pad(bb, ((0, pd),))
        wc_p = jnp.pad(wc, ((0, pd), (0, 0)))
    else:
        wa_p, wb_p, ba_p, bb_p, wc_p = wa, wb, ba, bb, wc
    w_ab = jnp.concatenate([wa_p, wb_p], axis=1).astype(mxu_dtype)     # (L, 2Dp)
    b_ab = jnp.concatenate([ba_p, bb_p]).reshape(1, 2 * D_pad).astype(jnp.float32)
    wc_t = jnp.transpose(wc_p).astype(jnp.float32)                     # (nc, Dp)
    bc_c = bc.reshape(n_classes, 1).astype(jnp.float32)

    # ---- tile / grid selection (tile is always a multiple of 128) -----------
    tile = min(tile_n, _round_up(N, 128))
    tile = max(128, (tile // 128) * 128)
    grid_n = pl.cdiv(N, tile)
    if two_tc and grid_n % 2 == 1 and tile >= 256:
        # v7x: aim for an even step count so both TensorCores get balanced work.
        tile //= 2
        grid_n = pl.cdiv(N, tile)
    grid = (grid_n,)

    kernel = functools.partial(_gated_attn_kernel, D=D_pad,
                               mxu_dtype=mxu_dtype, act_dtype=act_dtype)

    itemsize_w = jnp.dtype(mxu_dtype).itemsize
    cost = pl.CostEstimate(
        flops=2 * N * L * 2 * D_pad + 2 * N * D_pad * n_classes,
        transcendentals=2 * N * D_pad,
        bytes_accessed=(N * L * x.dtype.itemsize
                        + L * 2 * D_pad * itemsize_w
                        + (2 * D_pad + n_classes * D_pad + n_classes) * 4
                        + n_classes * N * 4),
    )

    A_t = pl.pallas_call(
        kernel,
        out_shape=jax.ShapeDtypeStruct((n_classes, N), jnp.float32),
        grid_spec=pltpu.PrefetchScalarGridSpec(
            num_scalar_prefetch=0,
            grid=grid,
            in_specs=[
                pl.BlockSpec((tile, L), lambda i: (i, 0)),              # x tile (f32)
                pl.BlockSpec((L, 2 * D_pad), lambda i: (0, 0)),         # [Wa|Wb]
                pl.BlockSpec((1, 2 * D_pad), lambda i: (0, 0)),         # [ba|bb]
                pl.BlockSpec((n_classes, D_pad), lambda i: (0, 0)),     # Wc^T
                pl.BlockSpec((n_classes, 1), lambda i: (0, 0)),         # bc
            ],
            out_specs=pl.BlockSpec((n_classes, tile), lambda i: (0, i)),
        ),
        compiler_params=pltpu.CompilerParams(
            dimension_semantics=("parallel",),
            vmem_limit_bytes=48 * 1024 * 1024),
        cost_estimate=cost,
    )(x, w_ab, b_ab, wc_t, bc_c)

    A = jnp.transpose(A_t).astype(x.dtype)    # (N, n_classes)
    return A, x


def init_params(key, L, D, n_classes, dtype=jnp.float32):
    """Deterministic synthetic parameters (nn.Linear weights stored as [in, out])."""
    k = jax.random.split(key, 6)
    scale_l = 1.0 / jnp.sqrt(L)
    scale_d = 1.0 / jnp.sqrt(D)
    wa = jax.random.uniform(k[0], (L, D), dtype, -scale_l, scale_l)
    ba = jax.random.uniform(k[1], (D,), dtype, -scale_l, scale_l)
    wb = jax.random.uniform(k[2], (L, D), dtype, -scale_l, scale_l)
    bb = jax.random.uniform(k[3], (D,), dtype, -scale_l, scale_l)
    wc = jax.random.uniform(k[4], (D, n_classes), dtype, -scale_d, scale_d)
    bc = jax.random.uniform(k[5], (n_classes,), dtype, -scale_d, scale_d)
    return wa, ba, wb, bb, wc, bc


if __name__ == "__main__":
    # Small shapes consistent with the module: L = feature dim, D = hidden,
    # n_classes = 1, N = bag size (number of patches).  N is deliberately NOT
    # a multiple of the tile to exercise the ragged-last-block path.
    N, L, D, n_classes = 200, 256, 128, 1

    key = jax.random.PRNGKey(0)
    kx, kp = jax.random.split(key)
    x = jax.random.normal(kx, (N, L), jnp.float32)
    wa, ba, wb, bb, wc, bc = init_params(kp, L, D, n_classes)

    # Pure-JAX reference (same math as the PyTorch forward, dropout=False).
    a_ref = jnp.tanh(x @ wa + ba)
    b_ref = jax.nn.sigmoid(x @ wb + bb)
    A_ref = (a_ref * b_ref) @ wc + bc

    # Exact-precision path (all-f32): tight tolerance.
    A32, x32 = attn_net_gated(x, wa, ba, wb, bb, wc, bc,
                              compute_dtype=jnp.float32)
    A32 = jax.block_until_ready(A32)
    assert A32.shape == (N, n_classes)
    assert jnp.allclose(A32, A_ref, atol=1e-5, rtol=1e-5)
    assert jnp.array_equal(x32, x)

    # Default fast path (bf16 MXU inputs, f32 accumulation, bf16 activations
    # on chips with a bf16 VPU): loose tolerance.
    A, x_out = attn_net_gated(x, wa, ba, wb, bb, wc, bc)
    A = jax.block_until_ready(A)
    x_out = jax.block_until_ready(x_out)
    assert A.shape == (N, n_classes)
    assert x_out.shape == (N, L)
    assert jnp.allclose(A, A_ref, atol=2e-2, rtol=2e-2)
    assert jnp.array_equal(x_out, x)

    print("KERNEL_OK")
</pallas_src>

<mosaic_0001>
module attributes {stable_mosaic.version = 11 : i64} {
  func.func @_gated_attn_kernel(%arg0: i32, %arg1: memref<256x256xf32, #tpu.memory_space<vmem>>, %arg2: memref<256x256xf32, #tpu.memory_space<vmem>>, %arg3: memref<1x256xf32, #tpu.memory_space<vmem>>, %arg4: memref<1x128xf32, #tpu.memory_space<vmem>>, %arg5: memref<1x1xf32, #tpu.memory_space<vmem>>, %arg6: memref<1x256xf32, #tpu.memory_space<vmem>>) attributes {dimension_semantics = [#tpu.dimension_semantics<parallel>], iteration_bounds = array<i64: 1>, scalar_prefetch = 0 : i64, scratch_operands = 0 : i64, tpu.core_type = #tpu.core_type<tc>, window_params = [{transform_indices = @transform_0, window_bounds = array<i64: 256, 256>}, {pipeline_mode = #tpu.pipeline_mode<synchronous>, transform_indices = @transform_1, window_bounds = array<i64: 256, 256>}, {pipeline_mode = #tpu.pipeline_mode<synchronous>, transform_indices = @transform_2, window_bounds = array<i64: 1, 256>}, {pipeline_mode = #tpu.pipeline_mode<synchronous>, transform_indices = @transform_3, window_bounds = array<i64: 1, 128>}, {pipeline_mode = #tpu.pipeline_mode<synchronous>, transform_indices = @transform_4, window_bounds = array<i64: 1, 1>}, {transform_indices = @transform_5, window_bounds = array<i64: 1, 256>}]} {
    %c0 = arith.constant 0 : index
    %c0_0 = arith.constant 0 : index
    %0 = vector.load %arg1[%c0, %c0_0] : memref<256x256xf32, #tpu.memory_space<vmem>>, vector<256x256xf32>
    %c0_1 = arith.constant 0 : index
    %c0_2 = arith.constant 0 : index
    %1 = vector.load %arg2[%c0_1, %c0_2] : memref<256x256xf32, #tpu.memory_space<vmem>>, vector<256x256xf32>
    %cst = arith.constant dense<0.000000e+00> : vector<256x256xf32>
    %2 = tpu.matmul %0, %1, %cst {dimension_numbers = #tpu.dot_dimension_numbers<[1], [0], [0], [1], [0, 0, 1, 1], [], []>} : vector<256x256xf32>, vector<256x256xf32>, vector<256x256xf32> -> vector<256x256xf32>
    %c0_3 = arith.constant 0 : index
    %c0_4 = arith.constant 0 : index
    %3 = vector.load %arg3[%c0_3, %c0_4] : memref<1x256xf32, #tpu.memory_space<vmem>>, vector<1x256xf32>
    %4 = vector.broadcast %3 : vector<1x256xf32> to vector<256x256xf32>
    %5 = arith.addf %2, %4 : vector<256x256xf32>
    %6 = vector.extract_strided_slice %5 {offsets = [0, 0], sizes = [256, 128], strides = [1, 1]} : vector<256x256xf32> to vector<256x128xf32>
    %7 = math.tanh %6 : vector<256x128xf32>
    %8 = vector.extract_strided_slice %5 {offsets = [0, 128], sizes = [256, 128], strides = [1, 1]} : vector<256x256xf32> to vector<256x128xf32>
    %9 = arith.negf %8 : vector<256x128xf32>
    %10 = math.exp %9 : vector<256x128xf32>
    %cst_5 = arith.constant 1.000000e+00 : f32
    %11 = vector.broadcast %cst_5 : f32 to vector<256x128xf32>
    %12 = arith.addf %11, %10 : vector<256x128xf32>
    %13 = arith.divf %11, %12 : vector<256x128xf32>
    %14 = arith.mulf %7, %13 : vector<256x128xf32>
    %c0_6 = arith.constant 0 : index
    %c0_7 = arith.constant 0 : index
    %15 = vector.load %arg4[%c0_6, %c0_7] : memref<1x128xf32, #tpu.memory_space<vmem>>, vector<1x128xf32>
    %cst_8 = arith.constant dense<0.000000e+00> : vector<1x256xf32>
    %16 = tpu.matmul %15, %14, %cst_8 {dimension_numbers = #tpu.dot_dimension_numbers<[1], [1], [0], [0], [0, 0, 1, 0], [], []>} : vector<1x128xf32>, vector<256x128xf32>, vector<1x256xf32> -> vector<1x256xf32>
    %c0_9 = arith.constant 0 : index
    %c0_10 = arith.constant 0 : index
    %17 = vector.load %arg5[%c0_9, %c0_10] : memref<1x1xf32, #tpu.memory_space<vmem>>, vector<1x1xf32>
    %18 = vector.broadcast %17 : vector<1x1xf32> to vector<1x256xf32>
    %19 = arith.addf %16, %18 : vector<1x256xf32>
    %c0_11 = arith.constant 0 : index
    %c0_12 = arith.constant 0 : index
    %20 = vector.load %arg6[%c0_11, %c0_12] : memref<1x256xf32, #tpu.memory_space<vmem>>, vector<1x256xf32>
    tpu.vector_store %arg6[%c0_11, %c0_12], %19 {strides = array<i32>} : memref<1x256xf32, #tpu.memory_space<vmem>>, vector<1x256xf32>,
    return
  }
  func.func @transform_0(%arg0: i32) -> (i32, i32) {
    %c0_i32 = arith.constant 0 : i32
    %c0_i32_0 = arith.constant 0 : i32
    return %arg0, %c0_i32 : i32, i32
  }
  func.func @transform_1(%arg0: i32) -> (i32, i32) {
    %c0_i32 = arith.constant 0 : i32
    %c0_i32_0 = arith.constant 0 : i32
    %c0_i32_1 = arith.constant 0 : i32
    return %c0_i32, %c0_i32_0 : i32, i32
  }
  func.func @transform_2(%arg0: i32) -> (i32, i32) {
    %c0_i32 = arith.constant 0 : i32
    %c0_i32_0 = arith.constant 0 : i32
    %c0_i32_1 = arith.constant 0 : i32
    return %c0_i32, %c0_i32_0 : i32, i32
  }
  func.func @transform_3(%arg0: i32) -> (i32, i32) {
    %c0_i32 = arith.constant 0 : i32
    %c0_i32_0 = arith.constant 0 : i32
    %c0_i32_1 = arith.constant 0 : i32
    return %c0_i32, %c0_i32_0 : i32, i32
  }
  func.func @transform_4(%arg0: i32) -> (i32, i32) {
    %c0_i32 = arith.constant 0 : i32
    %c0_i32_0 = arith.constant 0 : i32
    %c0_i32_1 = arith.constant 0 : i32
    return %c0_i32, %c0_i32_0 : i32, i32
  }
  func.func @transform_5(%arg0: i32) -> (i32, i32) {
    %c0_i32 = arith.constant 0 : i32
    %c0_i32_0 = arith.constant 0 : i32
    return %c0_i32, %arg0 : i32, i32
  }
}

</mosaic_0001>

<llo_original>
// kernel: tpu_custom_call.1
$region0: #{tpu_custom_call.1}
  #allocation0 [shape = 'u32[]', space=smem, size = 0x4, offset = 0x4, fixed_abs, tag = 'smem constant byte address 0x4 - core index']
  #allocation1 [shape = 'u32[72,128]{1,0:T(1,128)}', space=vmem, size = 0x9000, scoped, tag = 'internal scratch']
  #allocation2 [shape = 'f32[1,1]{1,0:T(1,128)S(1)}', space=vmem, size = 0x200, scoped, tag = 'scoped memory for tpu_custom_call.1']
  %s0 = inlined_call_operand.hbm [shape: f32[200,256], index: 0, kind: input, shape index: {}]
  %s1 = inlined_call_operand.hbm [shape: f32[256,256], index: 1, kind: input, shape index: {}]
  %s2 = inlined_call_operand.vmem [shape: f32[1,256], index: 2, kind: input, shape index: {}]
  %s3 = inlined_call_operand.vmem [shape: f32[1,128], index: 3, kind: input, shape index: {}]
  %s4 = inlined_call_operand.<no memory space> [shape: f32[1,1], index: 4, kind: input, shape index: {}]
  %s5 = inlined_call_operand.hbm [shape: f32[1,200], index: 5, kind: output, shape index: {}]
  %s6 = sld [smem:[#allocation0]]
  $region38: #{tpu_custom_call.1} parent=0
    _
  %s8 = ssub.s32 1, %s6
  %s9 = scalar_select 0, %s8, %s6
  %v10 = vstv %s4
  %11 = vst [vmem:[#allocation2] sm:$0x1] %v10
  $region1: #{tpu_custom_call.1} parent=0
    #allocation3 [shape = 'u8[262144]{0}', space=vmem, size = 0x40000, scoped, tag = 'input window, operand 0, single buffered']
    #allocation4 [shape = 's32[1]{0}', space=sflag, size = 0x4, scoped, tag = 'scoped memory for tpu_custom_call.1']
    #allocation5 [shape = 's32[1]{0}', space=sflag, size = 0x4, scoped, tag = 'scoped memory for tpu_custom_call.1']
    #allocation6 [shape = 'u8[262144]{0}', space=vmem, size = 0x40000, scoped, tag = 'input window, operand 1, single buffered']
    #allocation7 [shape = 's32[1]{0}', space=sflag, size = 0x4, scoped, tag = 'scoped memory for tpu_custom_call.1']
    #allocation8 [shape = 'u8[1024]{0}', space=vmem, size = 0x400, scoped, tag = 'output window, operand 0, single buffered']
    %12 = vsyncpa [#allocation4], 0
    %13 = vsyncpa [#allocation7], 0
    %14 = vsyncpa [#allocation5], 0
    // Predicated region
    $region2: #{tpu_custom_call.1} parent=1 // pred_check
      _
    $region3: #{tpu_custom_call.1} parent=1 // pred_check_branch
      %16 = sbr.rel (0) target = $region5
    $region4: #{tpu_custom_call.1} parent=1 // pred_region
      %18 = vsyncadd [#allocation4], 1792
      %s19 = sshll.u32 %s0, 4
      %s20 = int_to_ptr.hbm [resolvable:$true] %s19
      %s21 = sshll.u32 [#allocation3], 4
      %s22 = int_to_ptr.vmem [resolvable:$true] %s21
      %27 = dma.hbm_to_vmem [thread:$0]  %s20, 6400, %s22, [#allocation4], 256, 256, 16
    $region5: #{tpu_custom_call.1} parent=1 // pred_fallthru
      _
    // Predicated region
    $region6: #{tpu_custom_call.1} parent=1 // pred_check
      _
    $region7: #{tpu_custom_call.1} parent=1 // pred_check_branch
      %29 = sbr.rel (0) target = $region9
    $region8: #{tpu_custom_call.1} parent=1 // pred_region
      %31 = vsyncadd [#allocation7], 0
      %s32 = sshll.u32 %s1, 4
      %s33 = int_to_ptr.hbm [resolvable:$true] %s32
      %s34 = sshll.u32 [#allocation6], 4
      %s35 = int_to_ptr.vmem [resolvable:$true] %s34
      %40 = dma.hbm_to_vmem [thread:$0]  %s33, 8192, %s35, [#allocation7], 256, 256, 16
    $region9: #{tpu_custom_call.1} parent=1 // pred_fallthru
      _
    // Predicated region
    $region10: #{tpu_custom_call.1} parent=1 // pred_check
      _
    $region11: #{tpu_custom_call.1} parent=1 // pred_check_branch
      %42 = sbr.rel (0) target = $region13
    $region12: #{tpu_custom_call.1} parent=1 // pred_region
      _
    $region13: #{tpu_custom_call.1} parent=1 // pred_fallthru
      _
    // Predicated region
    $region14: #{tpu_custom_call.1} parent=1 // pred_check
      _
    $region15: #{tpu_custom_call.1} parent=1 // pred_check_branch
      %44 = sbr.rel (0) target = $region17
    $region16: #{tpu_custom_call.1} parent=1 // pred_region
      _
    $region17: #{tpu_custom_call.1} parent=1 // pred_fallthru
      _
    // Predicated region
    $region18: #{tpu_custom_call.1} parent=1 // pred_check
      _
    $region19: #{tpu_custom_call.1} parent=1 // pred_check_branch
      %46 = sbr.rel (0) target = $region21
    $region20: #{tpu_custom_call.1} parent=1 // pred_region
      _
    $region21: #{tpu_custom_call.1} parent=1 // pred_fallthru
      _
    // Predicated region
    $region22: #{tpu_custom_call.1} parent=1 // pred_check
      _
    $region23: #{tpu_custom_call.1} parent=1 // pred_check_branch
      %48 = sbr.rel (0) target = $region25
    $region24: #{tpu_custom_call.1} parent=1 // pred_region
      %50 = dma.done [#allocation4], 8192
    $region25: #{tpu_custom_call.1} parent=1 // pred_fallthru
      _
    // Predicated region
    $region26: #{tpu_custom_call.1} parent=1 // pred_check
      _
    $region27: #{tpu_custom_call.1} parent=1 // pred_check_branch
      %52 = sbr.rel (0) target = $region29
    $region28: #{tpu_custom_call.1} parent=1 // pred_region
      %54 = dma.done [#allocation7], 8192
    $region29: #{tpu_custom_call.1} parent=1 // pred_fallthru
      _
    %v55 = vld [vmem:[#allocation3] sm:$0xff]
    %v56 = vld [vmem:[#allocation3 + $0x8] sm:$0xff]
    %v57 = vld [vmem:[#allocation3 + $0x10] sm:$0xff]
    %v58 = vld [vmem:[#allocation3 + $0x18] sm:$0xff]
    %v59 = vld [vmem:[#allocation3 + $0x20] sm:$0xff]
    %v60 = vld [vmem:[#allocation3 + $0x28] sm:$0xff]
    %v61 = vld [vmem:[#allocation3 + $0x30] sm:$0xff]
    %v62 = vld [vmem:[#allocation3 + $0x38] sm:$0xff]
    %v63 = vld [vmem:[#allocation3 + $0x40] sm:$0xff]
    %v64 = vld [vmem:[#allocation3 + $0x48] sm:$0xff]
    %v65 = vld [vmem:[#allocation3 + $0x50] sm:$0xff]
    %v66 = vld [vmem:[#allocation3 + $0x58] sm:$0xff]
    %v67 = vld [vmem:[#allocation3 + $0x60] sm:$0xff]
    %v68 = vld [vmem:[#allocation3 + $0x68] sm:$0xff]
    %v69 = vld [vmem:[#allocation3 + $0x70] sm:$0xff]
    %v70 = vld [vmem:[#allocation3 + $0x78] sm:$0xff]
    %v71 = vld [vmem:[#allocation3 + $0x80] sm:$0xff]
    %v72 = vld [vmem:[#allocation3 + $0x88] sm:$0xff]
    %v73 = vld [vmem:[#allocation3 + $0x90] sm:$0xff]
    %v74 = vld [vmem:[#allocation3 + $0x98] sm:$0xff]
    %v75 = vld [vmem:[#allocation3 + $0xa0] sm:$0xff]
    %v76 = vld [vmem:[#allocation3 + $0xa8] sm:$0xff]
    %v77 = vld [vmem:[#allocation3 + $0xb0] sm:$0xff]
    %v78 = vld [vmem:[#allocation3 + $0xb8] sm:$0xff]
    %v79 = vld [vmem:[#allocation3 + $0xc0] sm:$0xff]
    %v80 = vld [vmem:[#allocation3 + $0xc8] sm:$0xff]
    %v81 = vld [vmem:[#allocation3 + $0xd0] sm:$0xff]
    %v82 = vld [vmem:[#allocation3 + $0xd8] sm:$0xff]
    %v83 = vld [vmem:[#allocation3 + $0xe0] sm:$0xff]
    %v84 = vld [vmem:[#allocation3 + $0xe8] sm:$0xff]
    %v85 = vld [vmem:[#allocation3 + $0xf0] sm:$0xff]
    %v86 = vld [vmem:[#allocation3 + $0xf8] sm:$0xff]
    %v87 = vld [vmem:[#allocation3 + $0x100] sm:$0xff]
    %v88 = vld [vmem:[#allocation3 + $0x108] sm:$0xff]
    %v89 = vld [vmem:[#allocation3 + $0x110] sm:$0xff]
    %v90 = vld [vmem:[#allocation3 + $0x118] sm:$0xff]
    %v91 = vld [vmem:[#allocation3 + $0x120] sm:$0xff]
    %v92 = vld [vmem:[#allocation3 + $0x128] sm:$0xff]
    %v93 = vld [vmem:[#allocation3 + $0x130] sm:$0xff]
    %v94 = vld [vmem:[#allocation3 + $0x138] sm:$0xff]
    %v95 = vld [vmem:[#allocation3 + $0x140] sm:$0xff]
    %v96 = vld [vmem:[#allocation3 + $0x148] sm:$0xff]
    %v97 = vld [vmem:[#allocation3 + $0x150] sm:$0xff]
    %v98 = vld [vmem:[#allocation3 + $0x158] sm:$0xff]
    %v99 = vld [vmem:[#allocation3 + $0x160] sm:$0xff]
    %v100 = vld [vmem:[#allocation3 + $0x168] sm:$0xff]
    %v101 = vld [vmem:[#allocation3 + $0x170] sm:$0xff]
    %v102 = vld [vmem:[#allocation3 + $0x178] sm:$0xff]
    %v103 = vld [vmem:[#allocation3 + $0x180] sm:$0xff]
    %v104 = vld [vmem:[#allocation3 + $0x188] sm:$0xff]
    %v105 = vld [vmem:[#allocation3 + $0x190] sm:$0xff]
    %v106 = vld [vmem:[#allocation3 + $0x198] sm:$0xff]
    %v107 = vld [vmem:[#allocation3 + $0x1a0] sm:$0xff]
    %v108 = vld [vmem:[#allocation3 + $0x1a8] sm:$0xff]
    %v109 = vld [vmem:[#allocation3 + $0x1b0] sm:$0xff]
    %v110 = vld [vmem:[#allocation3 + $0x1b8] sm:$0xff]
    %v111 = vld [vmem:[#allocation3 + $0x1c0] sm:$0xff]
    %v112 = vld [vmem:[#allocation3 + $0x1c8] sm:$0xff]
    %v113 = vld [vmem:[#allocation3 + $0x1d0] sm:$0xff]
    %v114 = vld [vmem:[#allocation3 + $0x1d8] sm:$0xff]
    %v115 = vld [vmem:[#allocation3 + $0x1e0] sm:$0xff]
    %v116 = vld [vmem:[#allocation3 + $0x1e8] sm:$0xff]
    %v117 = vld [vmem:[#allocation3 + $0x1f0] sm:$0xff]
    %v118 = vld [vmem:[#allocation3 + $0x1f8] sm:$0xff]
    %v119 = vld [vmem:[#allocation6] sm:$0xff]
    %v120 = vld [vmem:[#allocation6 + $0x8] sm:$0xff]
    %v121 = vld [vmem:[#allocation6 + $0x10] sm:$0xff]
    %v122 = vld [vmem:[#allocation6 + $0x18] sm:$0xff]
    %v123 = vld [vmem:[#allocation6 + $0x20] sm:$0xff]
    %v124 = vld [vmem:[#allocation6 + $0x28] sm:$0xff]
    %v125 = vld [vmem:[#allocation6 + $0x30] sm:$0xff]
    %v126 = vld [vmem:[#allocation6 + $0x38] sm:$0xff]
    %v127 = vld [vmem:[#allocation6 + $0x40] sm:$0xff]
    %v128 = vld [vmem:[#allocation6 + $0x48] sm:$0xff]
    %v129 = vld [vmem:[#allocation6 + $0x50] sm:$0xff]
    %v130 = vld [vmem:[#allocation6 + $0x58] sm:$0xff]
    %v131 = vld [vmem:[#allocation6 + $0x60] sm:$0xff]
    %v132 = vld [vmem:[#allocation6 + $0x68] sm:$0xff]
    %v133 = vld [vmem:[#allocation6 + $0x70] sm:$0xff]
    %v134 = vld [vmem:[#allocation6 + $0x78] sm:$0xff]
    %v135 = vld [vmem:[#allocation6 + $0x80] sm:$0xff]
    %v136 = vld [vmem:[#allocation6 + $0x88] sm:$0xff]
    %v137 = vld [vmem:[#allocation6 + $0x90] sm:$0xff]
    %v138 = vld [vmem:[#allocation6 + $0x98] sm:$0xff]
    %v139 = vld [vmem:[#allocation6 + $0xa0] sm:$0xff]
    %v140 = vld [vmem:[#allocation6 + $0xa8] sm:$0xff]
    %v141 = vld [vmem:[#allocation6 + $0xb0] sm:$0xff]
    %v142 = vld [vmem:[#allocation6 + $0xb8] sm:$0xff]
    %v143 = vld [vmem:[#allocation6 + $0xc0] sm:$0xff]
    %v144 = vld [vmem:[#allocation6 + $0xc8] sm:$0xff]
    %v145 = vld [vmem:[#allocation6 + $0xd0] sm:$0xff]
    %v146 = vld [vmem:[#allocation6 + $0xd8] sm:$0xff]
    %v147 = vld [vmem:[#allocation6 + $0xe0] sm:$0xff]
    %v148 = vld [vmem:[#allocation6 + $0xe8] sm:$0xff]
    %v149 = vld [vmem:[#allocation6 + $0xf0] sm:$0xff]
    %v150 = vld [vmem:[#allocation6 + $0xf8] sm:$0xff]
    %v151 = vld [vmem:[#allocation6 + $0x100] sm:$0xff]
    %v152 = vld [vmem:[#allocation6 + $0x108] sm:$0xff]
    %v153 = vld [vmem:[#allocation6 + $0x110] sm:$0xff]
    %v154 = vld [vmem:[#allocation6 + $0x118] sm:$0xff]
    %v155 = vld [vmem:[#allocation6 + $0x120] sm:$0xff]
    %v156 = vld [vmem:[#allocation6 + $0x128] sm:$0xff]
    %v157 = vld [vmem:[#allocation6 + $0x130] sm:$0xff]
    %v158 = vld [vmem:[#allocation6 + $0x138] sm:$0xff]
    %v159 = vld [vmem:[#allocation6 + $0x140] sm:$0xff]
    %v160 = vld [vmem:[#allocation6 + $0x148] sm:$0xff]
    %v161 = vld [vmem:[#allocation6 + $0x150] sm:$0xff]
    %v162 = vld [vmem:[#allocation6 + $0x158] sm:$0xff]
    %v163 = vld [vmem:[#allocation6 + $0x160] sm:$0xff]
    %v164 = vld [vmem:[#allocation6 + $0x168] sm:$0xff]
    %v165 = vld [vmem:[#allocation6 + $0x170] sm:$0xff]
    %v166 = vld [vmem:[#allocation6 + $0x178] sm:$0xff]
    %v167 = vld [vmem:[#allocation6 + $0x180] sm:$0xff]
    %v168 = vld [vmem:[#allocation6 + $0x188] sm:$0xff]
    %v169 = vld [vmem:[#allocation6 + $0x190] sm:$0xff]
    %v170 = vld [vmem:[#allocation6 + $0x198] sm:$0xff]
    %v171 = vld [vmem:[#allocation6 + $0x1a0] sm:$0xff]
    %v172 = vld [vmem:[#allocation6 + $0x1a8] sm:$0xff]
    %v173 = vld [vmem:[#allocation6 + $0x1b0] sm:$0xff]
    %v174 = vld [vmem:[#allocation6 + $0x1b8] sm:$0xff]
    %v175 = vld [vmem:[#allocation6 + $0x1c0] sm:$0xff]
    %v176 = vld [vmem:[#allocation6 + $0x1c8] sm:$0xff]
    %v177 = vld [vmem:[#allocation6 + $0x1d0] sm:$0xff]
    %v178 = vld [vmem:[#allocation6 + $0x1d8] sm:$0xff]
    %v179 = vld [vmem:[#allocation6 + $0x1e0] sm:$0xff]
    %v180 = vld [vmem:[#allocation6 + $0x1e8] sm:$0xff]
    %v181 = vld [vmem:[#allocation6 + $0x1f0] sm:$0xff]
    %v182 = vld [vmem:[#allocation6 + $0x1f8] sm:$0xff]
    %v183 = vld [vmem:[%s2] sm:$0x3]
    %v185 = vperm.slane %v183, 0
    %v186 = vperm.slane %v183, 1
    %189 = vmatpush.msra.mxu0 %v149
    %190 = vmatpush.msra.mxu0 %v147
    %191 = vmatpush.msra.mxu0 %v145
    %192 = vmatpush.msra.mxu0 %v143
    %193 = vmatpush.msra.mxu0 %v141
    %194 = vmatpush.msra.mxu0 %v139
    %195 = vmatpush.msra.mxu0 %v137
    %196 = vmatpush.msra.mxu0 %v135
    %197 = vmatpush.msra.mxu0 %v133
    %198 = vmatpush.msra.mxu0 %v131
    %199 = vmatpush.msra.mxu0 %v129
    %200 = vmatpush.msra.mxu0 %v127
    %201 = vmatpush.msra.mxu0 %v125
    %202 = vmatpush.msra.mxu0 %v123
    %203 = vmatpush.msra.mxu0 %v121
    %204 = vmatpush.msra.mxu0 %v119
    %205 = vmatmul.f32.gmra.mxu0 %v55
    %v206 = vpop.f32.mrf.mxu0
    %v207 = vadd.f32 %v185, %v206
    %208 = vmatmul.f32.gmra.mxu0 %v57
    %v209 = vpop.f32.mrf.mxu0
    %v210 = vadd.f32 %v185, %v209
    %211 = vmatmul.f32.gmra.mxu0 %v59
    %v212 = vpop.f32.mrf.mxu0
    %v213 = vadd.f32 %v185, %v212
    %214 = vmatmul.f32.gmra.mxu0 %v61
    %v215 = vpop.f32.mrf.mxu0
    %v216 = vadd.f32 %v185, %v215
    %217 = vmatmul.f32.gmra.mxu0 %v63
    %v218 = vpop.f32.mrf.mxu0
    %v219 = vadd.f32 %v185, %v218
    %220 = vmatmul.f32.gmra.mxu0 %v65
    %v221 = vpop.f32.mrf.mxu0
    %v222 = vadd.f32 %v185, %v221
    %223 = vmatmul.f32.gmra.mxu0 %v67
    %v224 = vpop.f32.mrf.mxu0
    %v225 = vadd.f32 %v185, %v224
    %226 = vmatmul.f32.gmra.mxu0 %v69
    %v227 = vpop.f32.mrf.mxu0
    %v228 = vadd.f32 %v185, %v227
    %229 = vmatmul.f32.gmra.mxu0 %v71
    %v230 = vpop.f32.mrf.mxu0
    %v231 = vadd.f32 %v185, %v230
    %232 = vmatmul.f32.gmra.mxu0 %v73
    %v233 = vpop.f32.mrf.mxu0
    %v234 = vadd.f32 %v185, %v233
    %235 = vmatmul.f32.gmra.mxu0 %v75
    %v236 = vpop.f32.mrf.mxu0
    %v237 = vadd.f32 %v185, %v236
    %238 = vmatmul.f32.gmra.mxu0 %v77
    %v239 = vpop.f32.mrf.mxu0
    %v240 = vadd.f32 %v185, %v239
    %241 = vmatmul.f32.gmra.mxu0 %v79
    %v242 = vpop.f32.mrf.mxu0
    %v243 = vadd.f32 %v185, %v242
    %244 = vmatmul.f32.gmra.mxu0 %v81
    %v245 = vpop.f32.mrf.mxu0
    %v246 = vadd.f32 %v185, %v245
    %247 = vmatmul.f32.gmra.mxu0 %v83
    %v248 = vpop.f32.mrf.mxu0
    %v249 = vadd.f32 %v185, %v248
    %250 = vmatmul.f32.gmra.mxu0 %v85
    %v251 = vpop.f32.mrf.mxu0
    %v252 = vadd.f32 %v185, %v251
    %253 = vmatmul.f32.gmra.mxu0 %v87
    %v254 = vpop.f32.mrf.mxu0
    %v255 = vadd.f32 %v185, %v254
    %256 = vmatmul.f32.gmra.mxu0 %v89
    %v257 = vpop.f32.mrf.mxu0
    %v258 = vadd.f32 %v185, %v257
    %259 = vmatmul.f32.gmra.mxu0 %v91
    %v260 = vpop.f32.mrf.mxu0
    %v261 = vadd.f32 %v185, %v260
    %262 = vmatmul.f32.gmra.mxu0 %v93
    %v263 = vpop.f32.mrf.mxu0
    %v264 = vadd.f32 %v185, %v263
    %265 = vmatmul.f32.gmra.mxu0 %v95
    %v266 = vpop.f32.mrf.mxu0
    %v267 = vadd.f32 %v185, %v266
    %268 = vmatmul.f32.gmra.mxu0 %v97
    %v269 = vpop.f32.mrf.mxu0
    %v270 = vadd.f32 %v185, %v269
    %271 = vmatmul.f32.gmra.mxu0 %v99
    %v272 = vpop.f32.mrf.mxu0
    %v273 = vadd.f32 %v185, %v272
    %274 = vmatmul.f32.gmra.mxu0 %v101
    %v275 = vpop.f32.mrf.mxu0
    %v276 = vadd.f32 %v185, %v275
    %277 = vmatmul.f32.gmra.mxu0 %v103
    %v278 = vpop.f32.mrf.mxu0
    %v279 = vadd.f32 %v185, %v278
    %280 = vmatmul.f32.gmra.mxu0 %v105
    %v281 = vpop.f32.mrf.mxu0
    %v282 = vadd.f32 %v185, %v281
    %283 = vmatmul.f32.gmra.mxu0 %v107
    %v284 = vpop.f32.mrf.mxu0
    %v285 = vadd.f32 %v185, %v284
    %286 = vmatmul.f32.gmra.mxu0 %v109
    %v287 = vpop.f32.mrf.mxu0
    %v288 = vadd.f32 %v185, %v287
    %289 = vmatmul.f32.gmra.mxu0 %v111
    %v290 = vpop.f32.mrf.mxu0
    %v291 = vadd.f32 %v185, %v290
    %292 = vmatmul.f32.gmra.mxu0 %v113
    %v293 = vpop.f32.mrf.mxu0
    %v294 = vadd.f32 %v185, %v293
    %295 = vmatmul.f32.gmra.mxu0 %v115
    %v296 = vpop.f32.mrf.mxu0
    %v297 = vadd.f32 %v185, %v296
    %298 = vmatmul.f32.gmra.mxu0 %v117
    %v299 = vpop.f32.mrf.mxu0
    %v300 = vadd.f32 %v185, %v299
    %301 = vdwg.mxu0
    %302 = vmatpush.msra.mxu0 %v181
    %303 = vmatpush.msra.mxu0 %v179
    %304 = vmatpush.msra.mxu0 %v177
    %305 = vmatpush.msra.mxu0 %v175
    %306 = vmatpush.msra.mxu0 %v173
    %307 = vmatpush.msra.mxu0 %v171
    %308 = vmatpush.msra.mxu0 %v169
    %309 = vmatpush.msra.mxu0 %v167
    %310 = vmatpush.msra.mxu0 %v165
    %311 = vmatpush.msra.mxu0 %v163
    %312 = vmatpush.msra.mxu0 %v161
    %313 = vmatpush.msra.mxu0 %v159
    %314 = vmatpush.msra.mxu0 %v157
    %315 = vmatpush.msra.mxu0 %v155
    %316 = vmatpush.msra.mxu0 %v153
    %317 = vmatpush.msra.mxu0 %v151
    %318 = vmatmul.f32.gmra.mxu0 %v56
    %v319 = vpop.f32.mrf.mxu0
    %v320 = vadd.f32 %v207, %v319
    %321 = vmatmul.f32.gmra.mxu0 %v58
    %v322 = vpop.f32.mrf.mxu0
    %v323 = vadd.f32 %v210, %v322
    %324 = vmatmul.f32.gmra.mxu0 %v60
    %v325 = vpop.f32.mrf.mxu0
    %v326 = vadd.f32 %v213, %v325
    %327 = vmatmul.f32.gmra.mxu0 %v62
    %v328 = vpop.f32.mrf.mxu0
    %v329 = vadd.f32 %v216, %v328
    %330 = vmatmul.f32.gmra.mxu0 %v64
    %v331 = vpop.f32.mrf.mxu0
    %v332 = vadd.f32 %v219, %v331
    %333 = vmatmul.f32.gmra.mxu0 %v66
    %v334 = vpop.f32.mrf.mxu0
    %v335 = vadd.f32 %v222, %v334
    %336 = vmatmul.f32.gmra.mxu0 %v68
    %v337 = vpop.f32.mrf.mxu0
    %v338 = vadd.f32 %v225, %v337
    %339 = vmatmul.f32.gmra.mxu0 %v70
    %v340 = vpop.f32.mrf.mxu0
    %v341 = vadd.f32 %v228, %v340
    %342 = vmatmul.f32.gmra.mxu0 %v72
    %v343 = vpop.f32.mrf.mxu0
    %v344 = vadd.f32 %v231, %v343
    %345 = vmatmul.f32.gmra.mxu0 %v74
    %v346 = vpop.f32.mrf.mxu0
    %v347 = vadd.f32 %v234, %v346
    %348 = vmatmul.f32.gmra.mxu0 %v76
    %v349 = vpop.f32.mrf.mxu0
    %v350 = vadd.f32 %v237, %v349
    %351 = vmatmul.f32.gmra.mxu0 %v78
    %v352 = vpop.f32.mrf.mxu0
    %v353 = vadd.f32 %v240, %v352
    %354 = vmatmul.f32.gmra.mxu0 %v80
    %v355 = vpop.f32.mrf.mxu0
    %v356 = vadd.f32 %v243, %v355
    %357 = vmatmul.f32.gmra.mxu0 %v82
    %v358 = vpop.f32.mrf.mxu0
    %v359 = vadd.f32 %v246, %v358
    %360 = vmatmul.f32.gmra.mxu0 %v84
    %v361 = vpop.f32.mrf.mxu0
    %v362 = vadd.f32 %v249, %v361
    %363 = vmatmul.f32.gmra.mxu0 %v86
    %v364 = vpop.f32.mrf.mxu0
    %v365 = vadd.f32 %v252, %v364
    %366 = vmatmul.f32.gmra.mxu0 %v88
    %v367 = vpop.f32.mrf.mxu0
    %v368 = vadd.f32 %v255, %v367
    %369 = vmatmul.f32.gmra.mxu0 %v90
    %v370 = vpop.f32.mrf.mxu0
    %v371 = vadd.f32 %v258, %v370
    %372 = vmatmul.f32.gmra.mxu0 %v92
    %v373 = vpop.f32.mrf.mxu0
    %v374 = vadd.f32 %v261, %v373
    %375 = vmatmul.f32.gmra.mxu0 %v94
    %v376 = vpop.f32.mrf.mxu0
    %v377 = vadd.f32 %v264, %v376
    %378 = vmatmul.f32.gmra.mxu0 %v96
    %v379 = vpop.f32.mrf.mxu0
    %v380 = vadd.f32 %v267, %v379
    %381 = vmatmul.f32.gmra.mxu0 %v98
    %v382 = vpop.f32.mrf.mxu0
    %v383 = vadd.f32 %v270, %v382
    %384 = vmatmul.f32.gmra.mxu0 %v100
    %v385 = vpop.f32.mrf.mxu0
    %v386 = vadd.f32 %v273, %v385
    %387 = vmatmul.f32.gmra.mxu0 %v102
    %v388 = vpop.f32.mrf.mxu0
    %v389 = vadd.f32 %v276, %v388
    %390 = vmatmul.f32.gmra.mxu0 %v104
    %v391 = vpop.f32.mrf.mxu0
    %v392 = vadd.f32 %v279, %v391
    %393 = vmatmul.f32.gmra.mxu0 %v106
    %v394 = vpop.f32.mrf.mxu0
    %v395 = vadd.f32 %v282, %v394
    %396 = vmatmul.f32.gmra.mxu0 %v108
    %v397 = vpop.f32.mrf.mxu0
    %v398 = vadd.f32 %v285, %v397
    %399 = vmatmul.f32.gmra.mxu0 %v110
    %v400 = vpop.f32.mrf.mxu0
    %v401 = vadd.f32 %v288, %v400
    %402 = vmatmul.f32.gmra.mxu0 %v112
    %v403 = vpop.f32.mrf.mxu0
    %v404 = vadd.f32 %v291, %v403
    %405 = vmatmul.f32.gmra.mxu0 %v114
    %v406 = vpop.f32.mrf.mxu0
    %v407 = vadd.f32 %v294, %v406
    %408 = vmatmul.f32.gmra.mxu0 %v116
    %v409 = vpop.f32.mrf.mxu0
    %v410 = vadd.f32 %v297, %v409
    %411 = vmatmul.f32.gmra.mxu0 %v118
    %v412 = vpop.f32.mrf.mxu0
    %v413 = vadd.f32 %v300, %v412
    %414 = vdwg.mxu0
    %415 = vmatpush.msra.mxu0 %v150
    %416 = vmatpush.msra.mxu0 %v148
    %417 = vmatpush.msra.mxu0 %v146
    %418 = vmatpush.msra.mxu0 %v144
    %419 = vmatpush.msra.mxu0 %v142
    %420 = vmatpush.msra.mxu0 %v140
    %421 = vmatpush.msra.mxu0 %v138
    %422 = vmatpush.msra.mxu0 %v136
    %423 = vmatpush.msra.mxu0 %v134
    %424 = vmatpush.msra.mxu0 %v132
    %425 = vmatpush.msra.mxu0 %v130
    %426 = vmatpush.msra.mxu0 %v128
    %427 = vmatpush.msra.mxu0 %v126
    %428 = vmatpush.msra.mxu0 %v124
    %429 = vmatpush.msra.mxu0 %v122
    %430 = vmatpush.msra.mxu0 %v120
    %431 = vmatmul.f32.gmra.mxu0 %v55
    %v432 = vpop.f32.mrf.mxu0
    %v433 = vadd.f32 %v186, %v432
    %434 = vmatmul.f32.gmra.mxu0 %v57
    %v435 = vpop.f32.mrf.mxu0
    %v436 = vadd.f32 %v186, %v435
    %437 = vmatmul.f32.gmra.mxu0 %v59
    %v438 = vpop.f32.mrf.mxu0
    %v439 = vadd.f32 %v186, %v438
    %440 = vmatmul.f32.gmra.mxu0 %v61
    %v441 = vpop.f32.mrf.mxu0
    %v442 = vadd.f32 %v186, %v441
    %443 = vmatmul.f32.gmra.mxu0 %v63
    %v444 = vpop.f32.mrf.mxu0
    %v445 = vadd.f32 %v186, %v444
    %446 = vmatmul.f32.gmra.mxu0 %v65
    %v447 = vpop.f32.mrf.mxu0
    %v448 = vadd.f32 %v186, %v447
    %449 = vmatmul.f32.gmra.mxu0 %v67
    %v450 = vpop.f32.mrf.mxu0
    %v451 = vadd.f32 %v186, %v450
    %452 = vmatmul.f32.gmra.mxu0 %v69
    %v453 = vpop.f32.mrf.mxu0
    %v454 = vadd.f32 %v186, %v453
    %455 = vmatmul.f32.gmra.mxu0 %v71
    %v456 = vpop.f32.mrf.mxu0
    %v457 = vadd.f32 %v186, %v456
    %458 = vmatmul.f32.gmra.mxu0 %v73
    %v459 = vpop.f32.mrf.mxu0
    %v460 = vadd.f32 %v186, %v459
    %461 = vmatmul.f32.gmra.mxu0 %v75
    %v462 = vpop.f32.mrf.mxu0
    %v463 = vadd.f32 %v186, %v462
    %464 = vmatmul.f32.gmra.mxu0 %v77
    %v465 = vpop.f32.mrf.mxu0
    %v466 = vadd.f32 %v186, %v465
    %467 = vmatmul.f32.gmra.mxu0 %v79
    %v468 = vpop.f32.mrf.mxu0
    %v469 = vadd.f32 %v186, %v468
    %470 = vmatmul.f32.gmra.mxu0 %v81
    %v471 = vpop.f32.mrf.mxu0
    %v472 = vadd.f32 %v186, %v471
    %473 = vmatmul.f32.gmra.mxu0 %v83
    %v474 = vpop.f32.mrf.mxu0
    %v475 = vadd.f32 %v186, %v474
    %476 = vmatmul.f32.gmra.mxu0 %v85
    %v477 = vpop.f32.mrf.mxu0
    %v478 = vadd.f32 %v186, %v477
    %479 = vmatmul.f32.gmra.mxu0 %v87
    %v480 = vpop.f32.mrf.mxu0
    %v481 = vadd.f32 %v186, %v480
    %482 = vmatmul.f32.gmra.mxu0 %v89
    %v483 = vpop.f32.mrf.mxu0
    %v484 = vadd.f32 %v186, %v483
    %485 = vmatmul.f32.gmra.mxu0 %v91
    %v486 = vpop.f32.mrf.mxu0
    %v487 = vadd.f32 %v186, %v486
    %488 = vmatmul.f32.gmra.mxu0 %v93
    %v489 = vpop.f32.mrf.mxu0
    %v490 = vadd.f32 %v186, %v489
    %491 = vmatmul.f32.gmra.mxu0 %v95
    %v492 = vpop.f32.mrf.mxu0
    %v493 = vadd.f32 %v186, %v492
    %494 = vmatmul.f32.gmra.mxu0 %v97
    %v495 = vpop.f32.mrf.mxu0
    %v496 = vadd.f32 %v186, %v495
    %497 = vmatmul.f32.gmra.mxu0 %v99
    %v498 = vpop.f32.mrf.mxu0
    %v499 = vadd.f32 %v186, %v498
    %500 = vmatmul.f32.gmra.mxu0 %v101
    %v501 = vpop.f32.mrf.mxu0
    %v502 = vadd.f32 %v186, %v501
    %503 = vmatmul.f32.gmra.mxu0 %v103
    %v504 = vpop.f32.mrf.mxu0
    %v505 = vadd.f32 %v186, %v504
    %506 = vmatmul.f32.gmra.mxu0 %v105
    %v507 = vpop.f32.mrf.mxu0
    %v508 = vadd.f32 %v186, %v507
    %509 = vmatmul.f32.gmra.mxu0 %v107
    %v510 = vpop.f32.mrf.mxu0
    %v511 = vadd.f32 %v186, %v510
    %512 = vmatmul.f32.gmra.mxu0 %v109
    %v513 = vpop.f32.mrf.mxu0
    %v514 = vadd.f32 %v186, %v513
    %515 = vmatmul.f32.gmra.mxu0 %v111
    %v516 = vpop.f32.mrf.mxu0
    %v517 = vadd.f32 %v186, %v516
    %518 = vmatmul.f32.gmra.mxu0 %v113
    %v519 = vpop.f32.mrf.mxu0
    %v520 = vadd.f32 %v186, %v519
    %521 = vmatmul.f32.gmra.mxu0 %v115
    %v522 = vpop.f32.mrf.mxu0
    %v523 = vadd.f32 %v186, %v522
    %524 = vmatmul.f32.gmra.mxu0 %v117
    %v525 = vpop.f32.mrf.mxu0
    %v526 = vadd.f32 %v186, %v525
    %527 = vdwg.mxu0
    %528 = vmatpush.msra.mxu0 %v182
    %529 = vmatpush.msra.mxu0 %v180
    %530 = vmatpush.msra.mxu0 %v178
    %531 = vmatpush.msra.mxu0 %v176
    %532 = vmatpush.msra.mxu0 %v174
    %533 = vmatpush.msra.mxu0 %v172
    %534 = vmatpush.msra.mxu0 %v170
    %535 = vmatpush.msra.mxu0 %v168
    %536 = vmatpush.msra.mxu0 %v166
    %537 = vmatpush.msra.mxu0 %v164
    %538 = vmatpush.msra.mxu0 %v162
    %539 = vmatpush.msra.mxu0 %v160
    %540 = vmatpush.msra.mxu0 %v158
    %541 = vmatpush.msra.mxu0 %v156
    %542 = vmatpush.msra.mxu0 %v154
    %543 = vmatpush.msra.mxu0 %v152
    %544 = vmatmul.f32.gmra.mxu0 %v56
    %v545 = vpop.f32.mrf.mxu0
    %v546 = vadd.f32 %v433, %v545
    %547 = vmatmul.f32.gmra.mxu0 %v58
    %v548 = vpop.f32.mrf.mxu0
    %v549 = vadd.f32 %v436, %v548
    %550 = vmatmul.f32.gmra.mxu0 %v60
    %v551 = vpop.f32.mrf.mxu0
    %v552 = vadd.f32 %v439, %v551
    %553 = vmatmul.f32.gmra.mxu0 %v62
    %v554 = vpop.f32.mrf.mxu0
    %v555 = vadd.f32 %v442, %v554
    %556 = vmatmul.f32.gmra.mxu0 %v64
    %v557 = vpop.f32.mrf.mxu0
    %v558 = vadd.f32 %v445, %v557
    %559 = vmatmul.f32.gmra.mxu0 %v66
    %v560 = vpop.f32.mrf.mxu0
    %v561 = vadd.f32 %v448, %v560
    %562 = vmatmul.f32.gmra.mxu0 %v68
    %v563 = vpop.f32.mrf.mxu0
    %v564 = vadd.f32 %v451, %v563
    %565 = vmatmul.f32.gmra.mxu0 %v70
    %v566 = vpop.f32.mrf.mxu0
    %v567 = vadd.f32 %v454, %v566
    %568 = vmatmul.f32.gmra.mxu0 %v72
    %v569 = vpop.f32.mrf.mxu0
    %v570 = vadd.f32 %v457, %v569
    %571 = vmatmul.f32.gmra.mxu0 %v74
    %v572 = vpop.f32.mrf.mxu0
    %v573 = vadd.f32 %v460, %v572
    %574 = vmatmul.f32.gmra.mxu0 %v76
    %v575 = vpop.f32.mrf.mxu0
    %v576 = vadd.f32 %v463, %v575
    %577 = vmatmul.f32.gmra.mxu0 %v78
    %v578 = vpop.f32.mrf.mxu0
    %v579 = vadd.f32 %v466, %v578
    %580 = vmatmul.f32.gmra.mxu0 %v80
    %v581 = vpop.f32.mrf.mxu0
    %v582 = vadd.f32 %v469, %v581
    %583 = vmatmul.f32.gmra.mxu0 %v82
    %v584 = vpop.f32.mrf.mxu0
    %v585 = vadd.f32 %v472, %v584
    %586 = vmatmul.f32.gmra.mxu0 %v84
    %v587 = vpop.f32.mrf.mxu0
    %v588 = vadd.f32 %v475, %v587
    %589 = vmatmul.f32.gmra.mxu0 %v86
    %v590 = vpop.f32.mrf.mxu0
    %v591 = vadd.f32 %v478, %v590
    %592 = vmatmul.f32.gmra.mxu0 %v88
    %v593 = vpop.f32.mrf.mxu0
    %v594 = vadd.f32 %v481, %v593
    %595 = vmatmul.f32.gmra.mxu0 %v90
    %v596 = vpop.f32.mrf.mxu0
    %v597 = vadd.f32 %v484, %v596
    %598 = vmatmul.f32.gmra.mxu0 %v92
    %v599 = vpop.f32.mrf.mxu0
    %v600 = vadd.f32 %v487, %v599
    %601 = vmatmul.f32.gmra.mxu0 %v94
    %v602 = vpop.f32.mrf.mxu0
    %v603 = vadd.f32 %v490, %v602
    %604 = vmatmul.f32.gmra.mxu0 %v96
    %v605 = vpop.f32.mrf.mxu0
    %v606 = vadd.f32 %v493, %v605
    %607 = vmatmul.f32.gmra.mxu0 %v98
    %v608 = vpop.f32.mrf.mxu0
    %v609 = vadd.f32 %v496, %v608
    %610 = vmatmul.f32.gmra.mxu0 %v100
    %v611 = vpop.f32.mrf.mxu0
    %v612 = vadd.f32 %v499, %v611
    %613 = vmatmul.f32.gmra.mxu0 %v102
    %v614 = vpop.f32.mrf.mxu0
    %v615 = vadd.f32 %v502, %v614
    %616 = vmatmul.f32.gmra.mxu0 %v104
    %v617 = vpop.f32.mrf.mxu0
    %v618 = vadd.f32 %v505, %v617
    %619 = vmatmul.f32.gmra.mxu0 %v106
    %v620 = vpop.f32.mrf.mxu0
    %v621 = vadd.f32 %v508, %v620
    %622 = vmatmul.f32.gmra.mxu0 %v108
    %v623 = vpop.f32.mrf.mxu0
    %v624 = vadd.f32 %v511, %v623
    %625 = vmatmul.f32.gmra.mxu0 %v110
    %v626 = vpop.f32.mrf.mxu0
    %v627 = vadd.f32 %v514, %v626
    %628 = vmatmul.f32.gmra.mxu0 %v112
    %v629 = vpop.f32.mrf.mxu0
    %v630 = vadd.f32 %v517, %v629
    %631 = vmatmul.f32.gmra.mxu0 %v114
    %v632 = vpop.f32.mrf.mxu0
    %v633 = vadd.f32 %v520, %v632
    %634 = vmatmul.f32.gmra.mxu0 %v116
    %v635 = vpop.f32.mrf.mxu0
    %v636 = vadd.f32 %v523, %v635
    %637 = vmatmul.f32.gmra.mxu0 %v118
    %v638 = vpop.f32.mrf.mxu0
    %v639 = vadd.f32 %v526, %v638
    %640 = vdwg.mxu0
    %v641 = vtanh.pop %v320
    %v642 = vtanh.pop %v323
    %v643 = vtanh.pop %v326
    %v644 = vtanh.pop %v329
    %v645 = vtanh.pop %v332
    %v646 = vtanh.pop %v335
    %v647 = vtanh.pop %v338
    %v648 = vtanh.pop %v341
    %v649 = vtanh.pop %v344
    %v650 = vtanh.pop %v347
    %v651 = vtanh.pop %v350
    %v652 = vtanh.pop %v353
    %v653 = vtanh.pop %v356
    %v654 = vtanh.pop %v359
    %v655 = vtanh.pop %v362
    %v656 = vtanh.pop %v365
    %v657 = vtanh.pop %v368
    %v658 = vtanh.pop %v371
    %v659 = vtanh.pop %v374
    %v660 = vtanh.pop %v377
    %v661 = vtanh.pop %v380
    %v662 = vtanh.pop %v383
    %v663 = vtanh.pop %v386
    %v664 = vtanh.pop %v389
    %v665 = vtanh.pop %v392
    %v666 = vtanh.pop %v395
    %v667 = vtanh.pop %v398
    %v668 = vtanh.pop %v401
    %v669 = vtanh.pop %v404
    %v670 = vtanh.pop %v407
    %v671 = vtanh.pop %v410
    %v672 = vtanh.pop %v413
    %v673 = vxor.u32 %v546, 2147483648
    %v674 = vxor.u32 %v549, 2147483648
    %v675 = vxor.u32 %v552, 2147483648
    %v676 = vxor.u32 %v555, 2147483648
    %v677 = vxor.u32 %v558, 2147483648
    %v678 = vxor.u32 %v561, 2147483648
    %v679 = vxor.u32 %v564, 2147483648
    %v680 = vxor.u32 %v567, 2147483648
    %v681 = vxor.u32 %v570, 2147483648
    %v682 = vxor.u32 %v573, 2147483648
    %v683 = vxor.u32 %v576, 2147483648
    %v684 = vxor.u32 %v579, 2147483648
    %v685 = vxor.u32 %v582, 2147483648
    %v686 = vxor.u32 %v585, 2147483648
    %v687 = vxor.u32 %v588, 2147483648
    %v688 = vxor.u32 %v591, 2147483648
    %v689 = vxor.u32 %v594, 2147483648
    %v690 = vxor.u32 %v597, 2147483648
    %v691 = vxor.u32 %v600, 2147483648
    %v692 = vxor.u32 %v603, 2147483648
    %v693 = vxor.u32 %v606, 2147483648
    %v694 = vxor.u32 %v609, 2147483648
    %v695 = vxor.u32 %v612, 2147483648
    %v696 = vxor.u32 %v615, 2147483648
    %v697 = vxor.u32 %v618, 2147483648
    %v698 = vxor.u32 %v621, 2147483648
    %v699 = vxor.u32 %v624, 2147483648
    %v700 = vxor.u32 %v627, 2147483648
    %v701 = vxor.u32 %v630, 2147483648
    %v702 = vxor.u32 %v633, 2147483648
    %v703 = vxor.u32 %v636, 2147483648
    %v704 = vxor.u32 %v639, 2147483648
    %v705 = vmul.f32 %v673, 1.442695
    %v706 = vpow.pop %v705
    %v707 = vmul.f32 %v674, 1.442695
    %v708 = vpow.pop %v707
    %v709 = vmul.f32 %v675, 1.442695
    %v710 = vpow.pop %v709
    %v711 = vmul.f32 %v676, 1.442695
    %v712 = vpow.pop %v711
    %v713 = vmul.f32 %v677, 1.442695
    %v714 = vpow.pop %v713
    %v715 = vmul.f32 %v678, 1.442695
    %v716 = vpow.pop %v715
    %v717 = vmul.f32 %v679, 1.442695
    %v718 = vpow.pop %v717
    %v719 = vmul.f32 %v680, 1.442695
    %v720 = vpow.pop %v719
    %v721 = vmul.f32 %v681, 1.442695
    %v722 = vpow.pop %v721
    %v723 = vmul.f32 %v682, 1.442695
    %v724 = vpow.pop %v723
    %v725 = vmul.f32 %v683, 1.442695
    %v726 = vpow.pop %v725
    %v727 = vmul.f32 %v684, 1.442695
    %v728 = vpow.pop %v727
    %v729 = vmul.f32 %v685, 1.442695
    %v730 = vpow.pop %v729
    %v731 = vmul.f32 %v686, 1.442695
    %v732 = vpow.pop %v731
    %v733 = vmul.f32 %v687, 1.442695
    %v734 = vpow.pop %v733
    %v735 = vmul.f32 %v688, 1.442695
    %v736 = vpow.pop %v735
    %v737 = vmul.f32 %v689, 1.442695
    %v738 = vpow.pop %v737
    %v739 = vmul.f32 %v690, 1.442695
    %v740 = vpow.pop %v739
    %v741 = vmul.f32 %v691, 1.442695
    %v742 = vpow.pop %v741
    %v743 = vmul.f32 %v692, 1.442695
    %v744 = vpow.pop %v743
    %v745 = vmul.f32 %v693, 1.442695
    %v746 = vpow.pop %v745
    %v747 = vmul.f32 %v694, 1.442695
    %v748 = vpow.pop %v747
    %v749 = vmul.f32 %v695, 1.442695
    %v750 = vpow.pop %v749
    %v751 = vmul.f32 %v696, 1.442695
    %v752 = vpow.pop %v751
    %v753 = vmul.f32 %v697, 1.442695
    %v754 = vpow.pop %v753
    %v755 = vmul.f32 %v698, 1.442695
    %v756 = vpow.pop %v755
    %v757 = vmul.f32 %v699, 1.442695
    %v758 = vpow.pop %v757
    %v759 = vmul.f32 %v700, 1.442695
    %v760 = vpow.pop %v759
    %v761 = vmul.f32 %v701, 1.442695
    %v762 = vpow.pop %v761
    %v763 = vmul.f32 %v702, 1.442695
    %v764 = vpow.pop %v763
    %v765 = vmul.f32 %v703, 1.442695
    %v766 = vpow.pop %v765
    %v767 = vmul.f32 %v704, 1.442695
    %v768 = vpow.pop %v767
    %v769 = vadd.f32 %v706, 1.0
    %v770 = vadd.f32 %v708, 1.0
    %v771 = vadd.f32 %v710, 1.0
    %v772 = vadd.f32 %v712, 1.0
    %v773 = vadd.f32 %v714, 1.0
    %v774 = vadd.f32 %v716, 1.0
    %v775 = vadd.f32 %v718, 1.0
    %v776 = vadd.f32 %v720, 1.0
    %v777 = vadd.f32 %v722, 1.0
    %v778 = vadd.f32 %v724, 1.0
    %v779 = vadd.f32 %v726, 1.0
    %v780 = vadd.f32 %v728, 1.0
    %v781 = vadd.f32 %v730, 1.0
    %v782 = vadd.f32 %v732, 1.0
    %v783 = vadd.f32 %v734, 1.0
    %v784 = vadd.f32 %v736, 1.0
    %v785 = vadd.f32 %v738, 1.0
    %v786 = vadd.f32 %v740, 1.0
    %v787 = vadd.f32 %v742, 1.0
    %v788 = vadd.f32 %v744, 1.0
    %v789 = vadd.f32 %v746, 1.0
    %v790 = vadd.f32 %v748, 1.0
    %v791 = vadd.f32 %v750, 1.0
    %v792 = vadd.f32 %v752, 1.0
    %v793 = vadd.f32 %v754, 1.0
    %v794 = vadd.f32 %v756, 1.0
    %v795 = vadd.f32 %v758, 1.0
    %v796 = vadd.f32 %v760, 1.0
    %v797 = vadd.f32 %v762, 1.0
    %v798 = vadd.f32 %v764, 1.0
    %v799 = vadd.f32 %v766, 1.0
    %v800 = vadd.f32 %v768, 1.0
    %v801 = vrcp.pop %v769
    %v802 = vmul.f32 %v769, %v801
    %v803 = vsub.f32 1.0, %v802
    %v804 = vmul.f32 %v801, %v803
    %v805 = vadd.f32 %v801, %v804
    %vm806 = vweird.f32 %v769
    %vm807 = vweird.f32 %v801
    %vm808 = vmor %vm806, %vm807
    %v809 = vsel %vm808, %v801, %v805
    %v810 = vand.u32 2147483647, %v769
    %vm811 = vcmp.eq.f32.partialorder %v810, 8.507059e+37
    %v812 = vand.u32 %v769, 2147483648
    %v813 = vor.u32 1.1754944e-38, %v812
    %v814 = vsel %vm811, %v813, %v809
    %v815 = vmul.f32 1.0, %v814
    %v816 = vrcp.pop %v770
    %v817 = vmul.f32 %v770, %v816
    %v818 = vsub.f32 1.0, %v817
    %v819 = vmul.f32 %v816, %v818
    %v820 = vadd.f32 %v816, %v819
    %vm821 = vweird.f32 %v770
    %vm822 = vweird.f32 %v816
    %vm823 = vmor %vm821, %vm822
    %v824 = vsel %vm823, %v816, %v820
    %v825 = vand.u32 2147483647, %v770
    %vm826 = vcmp.eq.f32.partialorder %v825, 8.507059e+37
    %v827 = vand.u32 %v770, 2147483648
    %v828 = vor.u32 1.1754944e-38, %v827
    %v829 = vsel %vm826, %v828, %v824
    %v830 = vmul.f32 1.0, %v829
    %v831 = vrcp.pop %v771
    %v832 = vmul.f32 %v771, %v831
    %v833 = vsub.f32 1.0, %v832
    %v834 = vmul.f32 %v831, %v833
    %v835 = vadd.f32 %v831, %v834
    %vm836 = vweird.f32 %v771
    %vm837 = vweird.f32 %v831
    %vm838 = vmor %vm836, %vm837
    %v839 = vsel %vm838, %v831, %v835
    %v840 = vand.u32 2147483647, %v771
    %vm841 = vcmp.eq.f32.partialorder %v840, 8.507059e+37
    %v842 = vand.u32 %v771, 2147483648
    %v843 = vor.u32 1.1754944e-38, %v842
    %v844 = vsel %vm841, %v843, %v839
    %v845 = vmul.f32 1.0, %v844
    %v846 = vrcp.pop %v772
    %v847 = vmul.f32 %v772, %v846
    %v848 = vsub.f32 1.0, %v847
    %v849 = vmul.f32 %v846, %v848
    %v850 = vadd.f32 %v846, %v849
    %vm851 = vweird.f32 %v772
    %vm852 = vweird.f32 %v846
    %vm853 = vmor %vm851, %vm852
    %v854 = vsel %vm853, %v846, %v850
    %v855 = vand.u32 2147483647, %v772
    %vm856 = vcmp.eq.f32.partialorder %v855, 8.507059e+37
    %v857 = vand.u32 %v772, 2147483648
    %v858 = vor.u32 1.1754944e-38, %v857
    %v859 = vsel %vm856, %v858, %v854
    %v860 = vmul.f32 1.0, %v859
    %v861 = vrcp.pop %v773
    %v862 = vmul.f32 %v773, %v861
    %v863 = vsub.f32 1.0, %v862
    %v864 = vmul.f32 %v861, %v863
    %v865 = vadd.f32 %v861, %v864
    %vm866 = vweird.f32 %v773
    %vm867 = vweird.f32 %v861
    %vm868 = vmor %vm866, %vm867
    %v869 = vsel %vm868, %v861, %v865
    %v870 = vand.u32 2147483647, %v773
    %vm871 = vcmp.eq.f32.partialorder %v870, 8.507059e+37
    %v872 = vand.u32 %v773, 2147483648
    %v873 = vor.u32 1.1754944e-38, %v872
    %v874 = vsel %vm871, %v873, %v869
    %v875 = vmul.f32 1.0, %v874
    %v876 = vrcp.pop %v774
    %v877 = vmul.f32 %v774, %v876
    %v878 = vsub.f32 1.0, %v877
    %v879 = vmul.f32 %v876, %v878
    %v880 = vadd.f32 %v876, %v879
    %vm881 = vweird.f32 %v774
    %vm882 = vweird.f32 %v876
    %vm883 = vmor %vm881, %vm882
    %v884 = vsel %vm883, %v876, %v880
    %v885 = vand.u32 2147483647, %v774
    %vm886 = vcmp.eq.f32.partialorder %v885, 8.507059e+37
    %v887 = vand.u32 %v774, 2147483648
    %v888 = vor.u32 1.1754944e-38, %v887
    %v889 = vsel %vm886, %v888, %v884
    %v890 = vmul.f32 1.0, %v889
    %v891 = vrcp.pop %v775
    %v892 = vmul.f32 %v775, %v891
    %v893 = vsub.f32 1.0, %v892
    %v894 = vmul.f32 %v891, %v893
    %v895 = vadd.f32 %v891, %v894
    %vm896 = vweird.f32 %v775
    %vm897 = vweird.f32 %v891
    %vm898 = vmor %vm896, %vm897
    %v899 = vsel %vm898, %v891, %v895
    %v900 = vand.u32 2147483647, %v775
    %vm901 = vcmp.eq.f32.partialorder %v900, 8.507059e+37
    %v902 = vand.u32 %v775, 2147483648
    %v903 = vor.u32 1.1754944e-38, %v902
    %v904 = vsel %vm901, %v903, %v899
    %v905 = vmul.f32 1.0, %v904
    %v906 = vrcp.pop %v776
    %v907 = vmul.f32 %v776, %v906
    %v908 = vsub.f32 1.0, %v907
    %v909 = vmul.f32 %v906, %v908
    %v910 = vadd.f32 %v906, %v909
    %vm911 = vweird.f32 %v776
    %vm912 = vweird.f32 %v906
    %vm913 = vmor %vm911, %vm912
    %v914 = vsel %vm913, %v906, %v910
    %v915 = vand.u32 2147483647, %v776
    %vm916 = vcmp.eq.f32.partialorder %v915, 8.507059e+37
    %v917 = vand.u32 %v776, 2147483648
    %v918 = vor.u32 1.1754944e-38, %v917
    %v919 = vsel %vm916, %v918, %v914
    %v920 = vmul.f32 1.0, %v919
    %v921 = vrcp.pop %v777
    %v922 = vmul.f32 %v777, %v921
    %v923 = vsub.f32 1.0, %v922
    %v924 = vmul.f32 %v921, %v923
    %v925 = vadd.f32 %v921, %v924
    %vm926 = vweird.f32 %v777
    %vm927 = vweird.f32 %v921
    %vm928 = vmor %vm926, %vm927
    %v929 = vsel %vm928, %v921, %v925
    %v930 = vand.u32 2147483647, %v777
    %vm931 = vcmp.eq.f32.partialorder %v930, 8.507059e+37
    %v932 = vand.u32 %v777, 2147483648
    %v933 = vor.u32 1.1754944e-38, %v932
    %v934 = vsel %vm931, %v933, %v929
    %v935 = vmul.f32 1.0, %v934
    %v936 = vrcp.pop %v778
    %v937 = vmul.f32 %v778, %v936
    %v938 = vsub.f32 1.0, %v937
    %v939 = vmul.f32 %v936, %v938
    %v940 = vadd.f32 %v936, %v939
    %vm941 = vweird.f32 %v778
    %vm942 = vweird.f32 %v936
    %vm943 = vmor %vm941, %vm942
    %v944 = vsel %vm943, %v936, %v940
    %v945 = vand.u32 2147483647, %v778
    %vm946 = vcmp.eq.f32.partialorder %v945, 8.507059e+37
    %v947 = vand.u32 %v778, 2147483648
    %v948 = vor.u32 1.1754944e-38, %v947
    %v949 = vsel %vm946, %v948, %v944
    %v950 = vmul.f32 1.0, %v949
    %v951 = vrcp.pop %v779
    %v952 = vmul.f32 %v779, %v951
    %v953 = vsub.f32 1.0, %v952
    %v954 = vmul.f32 %v951, %v953
    %v955 = vadd.f32 %v951, %v954
    %vm956 = vweird.f32 %v779
    %vm957 = vweird.f32 %v951
    %vm958 = vmor %vm956, %vm957
    %v959 = vsel %vm958, %v951, %v955
    %v960 = vand.u32 2147483647, %v779
    %vm961 = vcmp.eq.f32.partialorder %v960, 8.507059e+37
    %v962 = vand.u32 %v779, 2147483648
    %v963 = vor.u32 1.1754944e-38, %v962
    %v964 = vsel %vm961, %v963, %v959
    %v965 = vmul.f32 1.0, %v964
    %v966 = vrcp.pop %v780
    %v967 = vmul.f32 %v780, %v966
    %v968 = vsub.f32 1.0, %v967
    %v969 = vmul.f32 %v966, %v968
    %v970 = vadd.f32 %v966, %v969
    %vm971 = vweird.f32 %v780
    %vm972 = vweird.f32 %v966
    %vm973 = vmor %vm971, %vm972
    %v974 = vsel %vm973, %v966, %v970
    %v975 = vand.u32 2147483647, %v780
    %vm976 = vcmp.eq.f32.partialorder %v975, 8.507059e+37
    %v977 = vand.u32 %v780, 2147483648
    %v978 = vor.u32 1.1754944e-38, %v977
    %v979 = vsel %vm976, %v978, %v974
    %v980 = vmul.f32 1.0, %v979
    %v981 = vrcp.pop %v781
    %v982 = vmul.f32 %v781, %v981
    %v983 = vsub.f32 1.0, %v982
    %v984 = vmul.f32 %v981, %v983
    %v985 = vadd.f32 %v981, %v984
    %vm986 = vweird.f32 %v781
    %vm987 = vweird.f32 %v981
    %vm988 = vmor %vm986, %vm987
    %v989 = vsel %vm988, %v981, %v985
    %v990 = vand.u32 2147483647, %v781
    %vm991 = vcmp.eq.f32.partialorder %v990, 8.507059e+37
    %v992 = vand.u32 %v781, 2147483648
    %v993 = vor.u32 1.1754944e-38, %v992
    %v994 = vsel %vm991, %v993, %v989
    %v995 = vmul.f32 1.0, %v994
    %v996 = vrcp.pop %v782
    %v997 = vmul.f32 %v782, %v996
    %v998 = vsub.f32 1.0, %v997
    %v999 = vmul.f32 %v996, %v998
    %v1000 = vadd.f32 %v996, %v999
    %vm1001 = vweird.f32 %v782
    %vm1002 = vweird.f32 %v996
    %vm1003 = vmor %vm1001, %vm1002
    %v1004 = vsel %vm1003, %v996, %v1000
    %v1005 = vand.u32 2147483647, %v782
    %vm1006 = vcmp.eq.f32.partialorder %v1005, 8.507059e+37
    %v1007 = vand.u32 %v782, 2147483648
    %v1008 = vor.u32 1.1754944e-38, %v1007
    %v1009 = vsel %vm1006, %v1008, %v1004
    %v1010 = vmul.f32 1.0, %v1009
    %v1011 = vrcp.pop %v783
    %v1012 = vmul.f32 %v783, %v1011
    %v1013 = vsub.f32 1.0, %v1012
    %v1014 = vmul.f32 %v1011, %v1013
    %v1015 = vadd.f32 %v1011, %v1014
    %vm1016 = vweird.f32 %v783
    %vm1017 = vweird.f32 %v1011
    %vm1018 = vmor %vm1016, %vm1017
    %v1019 = vsel %vm1018, %v1011, %v1015
    %v1020 = vand.u32 2147483647, %v783
    %vm1021 = vcmp.eq.f32.partialorder %v1020, 8.507059e+37
    %v1022 = vand.u32 %v783, 2147483648
    %v1023 = vor.u32 1.1754944e-38, %v1022
    %v1024 = vsel %vm1021, %v1023, %v1019
    %v1025 = vmul.f32 1.0, %v1024
    %v1026 = vrcp.pop %v784
    %v1027 = vmul.f32 %v784, %v1026
    %v1028 = vsub.f32 1.0, %v1027
    %v1029 = vmul.f32 %v1026, %v1028
    %v1030 = vadd.f32 %v1026, %v1029
    %vm1031 = vweird.f32 %v784
    %vm1032 = vweird.f32 %v1026
    %vm1033 = vmor %vm1031, %vm1032
    %v1034 = vsel %vm1033, %v1026, %v1030
    %v1035 = vand.u32 2147483647, %v784
    %vm1036 = vcmp.eq.f32.partialorder %v1035, 8.507059e+37
    %v1037 = vand.u32 %v784, 2147483648
    %v1038 = vor.u32 1.1754944e-38, %v1037
    %v1039 = vsel %vm1036, %v1038, %v1034
    %v1040 = vmul.f32 1.0, %v1039
    %v1041 = vrcp.pop %v785
    %v1042 = vmul.f32 %v785, %v1041
    %v1043 = vsub.f32 1.0, %v1042
    %v1044 = vmul.f32 %v1041, %v1043
    %v1045 = vadd.f32 %v1041, %v1044
    %vm1046 = vweird.f32 %v785
    %vm1047 = vweird.f32 %v1041
    %vm1048 = vmor %vm1046, %vm1047
    %v1049 = vsel %vm1048, %v1041, %v1045
    %v1050 = vand.u32 2147483647, %v785
    %vm1051 = vcmp.eq.f32.partialorder %v1050, 8.507059e+37
    %v1052 = vand.u32 %v785, 2147483648
    %v1053 = vor.u32 1.1754944e-38, %v1052
    %v1054 = vsel %vm1051, %v1053, %v1049
    %v1055 = vmul.f32 1.0, %v1054
    %v1056 = vrcp.pop %v786
    %v1057 = vmul.f32 %v786, %v1056
    %v1058 = vsub.f32 1.0, %v1057
    %v1059 = vmul.f32 %v1056, %v1058
    %v1060 = vadd.f32 %v1056, %v1059
    %vm1061 = vweird.f32 %v786
    %vm1062 = vweird.f32 %v1056
    %vm1063 = vmor %vm1061, %vm1062
    %v1064 = vsel %vm1063, %v1056, %v1060
    %v1065 = vand.u32 2147483647, %v786
    %vm1066 = vcmp.eq.f32.partialorder %v1065, 8.507059e+37
    %v1067 = vand.u32 %v786, 2147483648
    %v1068 = vor.u32 1.1754944e-38, %v1067
    %v1069 = vsel %vm1066, %v1068, %v1064
    %v1070 = vmul.f32 1.0, %v1069
    %v1071 = vrcp.pop %v787
    %v1072 = vmul.f32 %v787, %v1071
    %v1073 = vsub.f32 1.0, %v1072
    %v1074 = vmul.f32 %v1071, %v1073
    %v1075 = vadd.f32 %v1071, %v1074
    %vm1076 = vweird.f32 %v787
    %vm1077 = vweird.f32 %v1071
    %vm1078 = vmor %vm1076, %vm1077
    %v1079 = vsel %vm1078, %v1071, %v1075
    %v1080 = vand.u32 2147483647, %v787
    %vm1081 = vcmp.eq.f32.partialorder %v1080, 8.507059e+37
    %v1082 = vand.u32 %v787, 2147483648
    %v1083 = vor.u32 1.1754944e-38, %v1082
    %v1084 = vsel %vm1081, %v1083, %v1079
    %v1085 = vmul.f32 1.0, %v1084
    %v1086 = vrcp.pop %v788
    %v1087 = vmul.f32 %v788, %v1086
    %v1088 = vsub.f32 1.0, %v1087
    %v1089 = vmul.f32 %v1086, %v1088
    %v1090 = vadd.f32 %v1086, %v1089
    %vm1091 = vweird.f32 %v788
    %vm1092 = vweird.f32 %v1086
    %vm1093 = vmor %vm1091, %vm1092
    %v1094 = vsel %vm1093, %v1086, %v1090
    %v1095 = vand.u32 2147483647, %v788
    %vm1096 = vcmp.eq.f32.partialorder %v1095, 8.507059e+37
    %v1097 = vand.u32 %v788, 2147483648
    %v1098 = vor.u32 1.1754944e-38, %v1097
    %v1099 = vsel %vm1096, %v1098, %v1094
    %v1100 = vmul.f32 1.0, %v1099
    %v1101 = vrcp.pop %v789
    %v1102 = vmul.f32 %v789, %v1101
    %v1103 = vsub.f32 1.0, %v1102
    %v1104 = vmul.f32 %v1101, %v1103
    %v1105 = vadd.f32 %v1101, %v1104
    %vm1106 = vweird.f32 %v789
    %vm1107 = vweird.f32 %v1101
    %vm1108 = vmor %vm1106, %vm1107
    %v1109 = vsel %vm1108, %v1101, %v1105
    %v1110 = vand.u32 2147483647, %v789
    %vm1111 = vcmp.eq.f32.partialorder %v1110, 8.507059e+37
    %v1112 = vand.u32 %v789, 2147483648
    %v1113 = vor.u32 1.1754944e-38, %v1112
    %v1114 = vsel %vm1111, %v1113, %v1109
    %v1115 = vmul.f32 1.0, %v1114
    %v1116 = vrcp.pop %v790
    %v1117 = vmul.f32 %v790, %v1116
    %v1118 = vsub.f32 1.0, %v1117
    %v1119 = vmul.f32 %v1116, %v1118
    %v1120 = vadd.f32 %v1116, %v1119
    %vm1121 = vweird.f32 %v790
    %vm1122 = vweird.f32 %v1116
    %vm1123 = vmor %vm1121, %vm1122
    %v1124 = vsel %vm1123, %v1116, %v1120
    %v1125 = vand.u32 2147483647, %v790
    %vm1126 = vcmp.eq.f32.partialorder %v1125, 8.507059e+37
    %v1127 = vand.u32 %v790, 2147483648
    %v1128 = vor.u32 1.1754944e-38, %v1127
    %v1129 = vsel %vm1126, %v1128, %v1124
    %v1130 = vmul.f32 1.0, %v1129
    %v1131 = vrcp.pop %v791
    %v1132 = vmul.f32 %v791, %v1131
    %v1133 = vsub.f32 1.0, %v1132
    %v1134 = vmul.f32 %v1131, %v1133
    %v1135 = vadd.f32 %v1131, %v1134
    %vm1136 = vweird.f32 %v791
    %vm1137 = vweird.f32 %v1131
    %vm1138 = vmor %vm1136, %vm1137
    %v1139 = vsel %vm1138, %v1131, %v1135
    %v1140 = vand.u32 2147483647, %v791
    %vm1141 = vcmp.eq.f32.partialorder %v1140, 8.507059e+37
    %v1142 = vand.u32 %v791, 2147483648
    %v1143 = vor.u32 1.1754944e-38, %v1142
    %v1144 = vsel %vm1141, %v1143, %v1139
    %v1145 = vmul.f32 1.0, %v1144
    %v1146 = vrcp.pop %v792
    %v1147 = vmul.f32 %v792, %v1146
    %v1148 = vsub.f32 1.0, %v1147
    %v1149 = vmul.f32 %v1146, %v1148
    %v1150 = vadd.f32 %v1146, %v1149
    %vm1151 = vweird.f32 %v792
    %vm1152 = vweird.f32 %v1146
    %vm1153 = vmor %vm1151, %vm1152
    %v1154 = vsel %vm1153, %v1146, %v1150
    %v1155 = vand.u32 2147483647, %v792
    %vm1156 = vcmp.eq.f32.partialorder %v1155, 8.507059e+37
    %v1157 = vand.u32 %v792, 2147483648
    %v1158 = vor.u32 1.1754944e-38, %v1157
    %v1159 = vsel %vm1156, %v1158, %v1154
    %v1160 = vmul.f32 1.0, %v1159
    %v1161 = vrcp.pop %v793
    %v1162 = vmul.f32 %v793, %v1161
    %v1163 = vsub.f32 1.0, %v1162
    %v1164 = vmul.f32 %v1161, %v1163
    %v1165 = vadd.f32 %v1161, %v1164
    %vm1166 = vweird.f32 %v793
    %vm1167 = vweird.f32 %v1161
    %vm1168 = vmor %vm1166, %vm1167
    %v1169 = vsel %vm1168, %v1161, %v1165
    %v1170 = vand.u32 2147483647, %v793
    %vm1171 = vcmp.eq.f32.partialorder %v1170, 8.507059e+37
    %v1172 = vand.u32 %v793, 2147483648
    %v1173 = vor.u32 1.1754944e-38, %v1172
    %v1174 = vsel %vm1171, %v1173, %v1169
    %v1175 = vmul.f32 1.0, %v1174
    %v1176 = vrcp.pop %v794
    %v1177 = vmul.f32 %v794, %v1176
    %v1178 = vsub.f32 1.0, %v1177
    %v1179 = vmul.f32 %v1176, %v1178
    %v1180 = vadd.f32 %v1176, %v1179
    %vm1181 = vweird.f32 %v794
    %vm1182 = vweird.f32 %v1176
    %vm1183 = vmor %vm1181, %vm1182
    %v1184 = vsel %vm1183, %v1176, %v1180
    %v1185 = vand.u32 2147483647, %v794
    %vm1186 = vcmp.eq.f32.partialorder %v1185, 8.507059e+37
    %v1187 = vand.u32 %v794, 2147483648
    %v1188 = vor.u32 1.1754944e-38, %v1187
    %v1189 = vsel %vm1186, %v1188, %v1184
    %v1190 = vmul.f32 1.0, %v1189
    %v1191 = vrcp.pop %v795
    %v1192 = vmul.f32 %v795, %v1191
    %v1193 = vsub.f32 1.0, %v1192
    %v1194 = vmul.f32 %v1191, %v1193
    %v1195 = vadd.f32 %v1191, %v1194
    %vm1196 = vweird.f32 %v795
    %vm1197 = vweird.f32 %v1191
    %vm1198 = vmor %vm1196, %vm1197
    %v1199 = vsel %vm1198, %v1191, %v1195
    %v1200 = vand.u32 2147483647, %v795
    %vm1201 = vcmp.eq.f32.partialorder %v1200, 8.507059e+37
    %v1202 = vand.u32 %v795, 2147483648
    %v1203 = vor.u32 1.1754944e-38, %v1202
    %v1204 = vsel %vm1201, %v1203, %v1199
    %v1205 = vmul.f32 1.0, %v1204
    %v1206 = vrcp.pop %v796
    %v1207 = vmul.f32 %v796, %v1206
    %v1208 = vsub.f32 1.0, %v1207
    %v1209 = vmul.f32 %v1206, %v1208
    %v1210 = vadd.f32 %v1206, %v1209
    %vm1211 = vweird.f32 %v796
    %vm1212 = vweird.f32 %v1206
    %vm1213 = vmor %vm1211, %vm1212
    %v1214 = vsel %vm1213, %v1206, %v1210
    %v1215 = vand.u32 2147483647, %v796
    %vm1216 = vcmp.eq.f32.partialorder %v1215, 8.507059e+37
    %v1217 = vand.u32 %v796, 2147483648
    %v1218 = vor.u32 1.1754944e-38, %v1217
    %v1219 = vsel %vm1216, %v1218, %v1214
    %v1220 = vmul.f32 1.0, %v1219
    %v1221 = vrcp.pop %v797
    %v1222 = vmul.f32 %v797, %v1221
    %v1223 = vsub.f32 1.0, %v1222
    %v1224 = vmul.f32 %v1221, %v1223
    %v1225 = vadd.f32 %v1221, %v1224
    %vm1226 = vweird.f32 %v797
    %vm1227 = vweird.f32 %v1221
    %vm1228 = vmor %vm1226, %vm1227
    %v1229 = vsel %vm1228, %v1221, %v1225
    %v1230 = vand.u32 2147483647, %v797
    %vm1231 = vcmp.eq.f32.partialorder %v1230, 8.507059e+37
    %v1232 = vand.u32 %v797, 2147483648
    %v1233 = vor.u32 1.1754944e-38, %v1232
    %v1234 = vsel %vm1231, %v1233, %v1229
    %v1235 = vmul.f32 1.0, %v1234
    %v1236 = vrcp.pop %v798
    %v1237 = vmul.f32 %v798, %v1236
    %v1238 = vsub.f32 1.0, %v1237
    %v1239 = vmul.f32 %v1236, %v1238
    %v1240 = vadd.f32 %v1236, %v1239
    %vm1241 = vweird.f32 %v798
    %vm1242 = vweird.f32 %v1236
    %vm1243 = vmor %vm1241, %vm1242
    %v1244 = vsel %vm1243, %v1236, %v1240
    %v1245 = vand.u32 2147483647, %v798
    %vm1246 = vcmp.eq.f32.partialorder %v1245, 8.507059e+37
    %v1247 = vand.u32 %v798, 2147483648
    %v1248 = vor.u32 1.1754944e-38, %v1247
    %v1249 = vsel %vm1246, %v1248, %v1244
    %v1250 = vmul.f32 1.0, %v1249
    %v1251 = vrcp.pop %v799
    %v1252 = vmul.f32 %v799, %v1251
    %v1253 = vsub.f32 1.0, %v1252
    %v1254 = vmul.f32 %v1251, %v1253
    %v1255 = vadd.f32 %v1251, %v1254
    %vm1256 = vweird.f32 %v799
    %vm1257 = vweird.f32 %v1251
    %vm1258 = vmor %vm1256, %vm1257
    %v1259 = vsel %vm1258, %v1251, %v1255
    %v1260 = vand.u32 2147483647, %v799
    %vm1261 = vcmp.eq.f32.partialorder %v1260, 8.507059e+37
    %v1262 = vand.u32 %v799, 2147483648
    %v1263 = vor.u32 1.1754944e-38, %v1262
    %v1264 = vsel %vm1261, %v1263, %v1259
    %v1265 = vmul.f32 1.0, %v1264
    %v1266 = vrcp.pop %v800
    %v1267 = vmul.f32 %v800, %v1266
    %v1268 = vsub.f32 1.0, %v1267
    %v1269 = vmul.f32 %v1266, %v1268
    %v1270 = vadd.f32 %v1266, %v1269
    %vm1271 = vweird.f32 %v800
    %vm1272 = vweird.f32 %v1266
    %vm1273 = vmor %vm1271, %vm1272
    %v1274 = vsel %vm1273, %v1266, %v1270
    %v1275 = vand.u32 2147483647, %v800
    %vm1276 = vcmp.eq.f32.partialorder %v1275, 8.507059e+37
    %v1277 = vand.u32 %v800, 2147483648
    %v1278 = vor.u32 1.1754944e-38, %v1277
    %v1279 = vsel %vm1276, %v1278, %v1274
    %v1280 = vmul.f32 1.0, %v1279
    %v1281 = vmul.f32 %v641, %v815
    %v1282 = vmul.f32 %v642, %v830
    %v1283 = vmul.f32 %v643, %v845
    %v1284 = vmul.f32 %v644, %v860
    %v1285 = vmul.f32 %v645, %v875
    %v1286 = vmul.f32 %v646, %v890
    %v1287 = vmul.f32 %v647, %v905
    %v1288 = vmul.f32 %v648, %v920
    %v1289 = vmul.f32 %v649, %v935
    %v1290 = vmul.f32 %v650, %v950
    %v1291 = vmul.f32 %v651, %v965
    %v1292 = vmul.f32 %v652, %v980
    %v1293 = vmul.f32 %v653, %v995
    %v1294 = vmul.f32 %v654, %v1010
    %v1295 = vmul.f32 %v655, %v1025
    %v1296 = vmul.f32 %v656, %v1040
    %v1297 = vmul.f32 %v657, %v1055
    %v1298 = vmul.f32 %v658, %v1070
    %v1299 = vmul.f32 %v659, %v1085
    %v1300 = vmul.f32 %v660, %v1100
    %v1301 = vmul.f32 %v661, %v1115
    %v1302 = vmul.f32 %v662, %v1130
    %v1303 = vmul.f32 %v663, %v1145
    %v1304 = vmul.f32 %v664, %v1160
    %v1305 = vmul.f32 %v665, %v1175
    %v1306 = vmul.f32 %v666, %v1190
    %v1307 = vmul.f32 %v667, %v1205
    %v1308 = vmul.f32 %v668, %v1220
    %v1309 = vmul.f32 %v669, %v1235
    %v1310 = vmul.f32 %v670, %v1250
    %v1311 = vmul.f32 %v671, %v1265
    %v1312 = vmul.f32 %v672, %v1280
    %v1313 = vld [vmem:[%s3] sm:$0x1]
    %v1314 = vld [vmem:[#allocation2] sm:$0x1]
    %1316 = vset.pattern.permute.xlu0 0
    %1317 = vperm.xlu0 %1316, %v1314
    %v1318 = vpop.permute.xlu0 %1317
    %v1320 = vperm.slane %v1318, 0
    %1321 = vmatpush.xpose.msra.mxu0 %v1296
    %1322 = vmatpush.xpose.msra.mxu0 %v1295
    %1323 = vmatpush.xpose.msra.mxu0 %v1294
    %1324 = vmatpush.xpose.msra.mxu0 %v1293
    %1325 = vmatpush.xpose.msra.mxu0 %v1292
    %1326 = vmatpush.xpose.msra.mxu0 %v1291
    %1327 = vmatpush.xpose.msra.mxu0 %v1290
    %1328 = vmatpush.xpose.msra.mxu0 %v1289
    %1329 = vmatpush.xpose.msra.mxu0 %v1288
    %1330 = vmatpush.xpose.msra.mxu0 %v1287
    %1331 = vmatpush.xpose.msra.mxu0 %v1286
    %1332 = vmatpush.xpose.msra.mxu0 %v1285
    %1333 = vmatpush.xpose.msra.mxu0 %v1284
    %1334 = vmatpush.xpose.msra.mxu0 %v1283
    %1335 = vmatpush.xpose.msra.mxu0 %v1282
    %1336 = vmatpush.xpose.msra.mxu0 %v1281
    %1337 = vmatmul.f32.gmra.mxu0 %v1313
    %v1338 = vpop.f32.mrf.mxu0
    %v1339 = vadd.f32 %v1320, %v1338
    %1340 = vdwg.mxu0
    %1341 = vmatpush.xpose.msra.mxu0 %v1312
    %1342 = vmatpush.xpose.msra.mxu0 %v1311
    %1343 = vmatpush.xpose.msra.mxu0 %v1310
    %1344 = vmatpush.xpose.msra.mxu0 %v1309
    %1345 = vmatpush.xpose.msra.mxu0 %v1308
    %1346 = vmatpush.xpose.msra.mxu0 %v1307
    %1347 = vmatpush.xpose.msra.mxu0 %v1306
    %1348 = vmatpush.xpose.msra.mxu0 %v1305
    %1349 = vmatpush.xpose.msra.mxu0 %v1304
    %1350 = vmatpush.xpose.msra.mxu0 %v1303
    %1351 = vmatpush.xpose.msra.mxu0 %v1302
    %1352 = vmatpush.xpose.msra.mxu0 %v1301
    %1353 = vmatpush.xpose.msra.mxu0 %v1300
    %1354 = vmatpush.xpose.msra.mxu0 %v1299
    %1355 = vmatpush.xpose.msra.mxu0 %v1298
    %1356 = vmatpush.xpose.msra.mxu0 %v1297
    %1357 = vmatmul.f32.gmra.mxu0 %v1313
    %v1358 = vpop.f32.mrf.mxu0
    %v1359 = vadd.f32 %v1320, %v1358
    %1360 = vdwg.mxu0
    %v1363 = vrot.slane %v1359, 7
    %vm1364 = vcmask 1040384
    %v1365 = vsel %vm1364, %v1339, %v1363
    %v1367 = vlaneseq
    %vm1368 = vcmp.ge.s32.totalorder %v1367, 0
    %vm1369 = vcmp.lt.s32.totalorder %v1367, 256
    %vm1370 = vmand %vm1368, %vm1369
    %1371 = vst.msk [vmem:[#allocation8] sm:$0x3] %vm1370, %v1365
    // Predicated region
    $region30: #{tpu_custom_call.1} parent=1 // pred_check
      _
    $region31: #{tpu_custom_call.1} parent=1 // pred_check_branch
      %1373 = sbr.rel (0) target = $region33
    $region32: #{tpu_custom_call.1} parent=1 // pred_region
      %1375 = vsyncadd [#allocation5], 0
      %s1377 = sshll.u32 [#allocation8], 4
      %s1378 = int_to_ptr.vmem [resolvable:$true] %s1377
      %s1379 = sshll.u32 %s5, 4
      %s1380 = int_to_ptr.hbm [resolvable:$true] %s1379
      %1382 = dma.vmem_to_hbm [thread:$0]  %s1378, 32, %s1380, [#allocation5]
    $region33: #{tpu_custom_call.1} parent=1 // pred_fallthru
      _
    // Predicated region
    $region34: #{tpu_custom_call.1} parent=1 // pred_check
      _
    $region35: #{tpu_custom_call.1} parent=1 // pred_check_branch
      %1384 = sbr.rel (0) target = $region37
    $region36: #{tpu_custom_call.1} parent=1 // pred_region
      %1386 = dma.done [#allocation5], 32
    $region37: #{tpu_custom_call.1} parent=1 // pred_fallthru
      _
    %1387 = vsyncpa [#allocation4], 1
    %1388 = vsyncpa [#allocation7], 1
    %1389 = vsyncpa [#allocation5], 1

</llo_original>
